<compile_context>
chip_gen: v5e
topology: v5e:2x2
jax: 0.10.0
libtpu: 0.0.40
codegen_flags: <defaults>
</compile_context>

<pallas_src>
import functools

import jax
import jax.numpy as jnp
from jax.experimental import pallas as pl
from jax.experimental.pallas import tpu as pltpu


def _goggle_loss_kernel(xr_ref, x_ref, mu_ref, lv_ref, g_ref, *rest,
                        alpha, beta, inv_n_x, inv_n_mu, inv_n_g, has_prior):
    if has_prior:
        gp_ref, out_ref, gacc_ref = rest
    else:
        out_ref, gacc_ref = rest

    step = pl.program_id(0)
    last = pl.num_programs(0) - 1

    @pl.when(step == 0)
    def _init():
        gacc_ref[...] = jnp.zeros_like(gacc_ref)

    # Graph L1 accumulation: pure VPU per step (no per-tile reduce, no divide).
    g = g_ref[...].astype(jnp.float32)
    if has_prior:
        g = g - gp_ref[...].astype(jnp.float32)
    gacc_ref[...] += jnp.abs(g)

    @pl.when(step == last)
    def _finalize():
        # MSE term (resident full block, reduced once).
        diff = xr_ref[...].astype(jnp.float32) - x_ref[...].astype(jnp.float32)
        loss_mse = jnp.sum(diff * diff) * inv_n_x

        # KLD term.
        mu = mu_ref[...].astype(jnp.float32)
        lv = lv_ref[...].astype(jnp.float32)
        loss_kld = -0.5 * jnp.sum(1.0 + lv - mu * mu - jnp.exp(lv)) * inv_n_mu

        # Graph term: one cross-lane reduce of the accumulator, scaled by 1/numel.
        loss_graph = jnp.sum(gacc_ref[...]) * inv_n_g

        loss = loss_mse + alpha * loss_kld + beta * loss_graph

        # Pack [loss, mse, kld, graph] into one lane-dense (1, 128) tile.
        lane = jax.lax.broadcasted_iota(jnp.int32, out_ref.shape, 1)
        out_ref[...] = jnp.where(
            lane == 0, loss,
            jnp.where(lane == 1, loss_mse,
                      jnp.where(lane == 2, loss_kld,
                                jnp.where(lane == 3, loss_graph, 0.0))))


def _pick_row_tile(rows, cols, itemsize, target_bytes=2 * 1024 * 1024):
    """Largest row tile that divides `rows`, keeps blocks ~target_bytes, and
    respects sublane packing for narrow dtypes. Falls back to a single
    full-array block (always a legal BlockSpec)."""
    min_rows = 8 * max(1, 4 // int(itemsize))   # f32: 8, bf16: 16, int8/fp8: 32
    if rows <= min_rows:
        return rows
    cap = max(min_rows, min(rows, target_bytes // max(1, cols * int(itemsize))))
    cap -= cap % min_rows
    cap = max(cap, min_rows)
    for t in range(cap, min_rows - 1, -min_rows):
        if rows % t == 0:
            return t
    return rows


def _resident2d(shape):
    # Full-array block with a constant block index: fetched once, stays in VMEM.
    return pl.BlockSpec(tuple(shape), lambda s: (0, 0))


def goggle_loss(x_recon, x, mu, logvar, graph, graph_prior=None,
                alpha=1.0, beta=0.0):
    """Pallas equivalent of GoggleLoss.forward. Returns (loss, mse, kld, graph)."""
    has_prior = graph_prior is not None
    R, C = graph.shape
    tr = _pick_row_tile(R, C, graph.dtype.itemsize)
    steps = R // tr

    inv_n_x = 1.0 / float(x.size)
    inv_n_mu = 1.0 / float(mu.size)
    inv_n_g = 1.0 / float(graph.size)

    kernel = functools.partial(
        _goggle_loss_kernel,
        alpha=float(alpha), beta=float(beta),
        inv_n_x=inv_n_x, inv_n_mu=inv_n_mu, inv_n_g=inv_n_g,
        has_prior=has_prior)

    in_specs = [
        _resident2d(x_recon.shape),
        _resident2d(x.shape),
        _resident2d(mu.shape),
        _resident2d(logvar.shape),
        pl.BlockSpec((tr, C), lambda s: (s, 0)),   # tiled graph rows
    ]
    inputs = [x_recon, x, mu, logvar, graph]
    if has_prior:
        in_specs.append(pl.BlockSpec((tr, C), lambda s: (s, 0)))
        inputs.append(graph_prior)

    # Explicit VMEM budget (double-buffered graph/prior tiles + f32 accumulator
    # + resident small arrays), clamped so we stay safely inside v7x's 64 MiB.
    f32b = 4
    g_blk = tr * C * graph.dtype.itemsize
    gp_blk = tr * C * graph_prior.dtype.itemsize if has_prior else 0
    resident_bytes = 2 * (x_recon.nbytes + x.nbytes + mu.nbytes + logvar.nbytes)
    needed = (2 * g_blk + 2 * gp_blk + tr * C * f32b
              + resident_bytes + 2 * 128 * f32b)
    vmem_limit = int(min(max(needed + (4 << 20), 16 << 20), 56 << 20))

    bytes_accessed = (x_recon.nbytes + x.nbytes + mu.nbytes + logvar.nbytes
                      + graph.nbytes
                      + (graph_prior.nbytes if has_prior else 0) + 512)
    cost = pl.CostEstimate(
        flops=int(3 * x.size + 7 * mu.size
                  + (3 if has_prior else 2) * graph.size + 16),
        transcendentals=int(mu.size),
        bytes_accessed=int(bytes_accessed))

    # TODO(synk): on v7x, add a leading size-2 "parallel" grid axis with
    # per-core partial sums (combined in the wrapper) to use both TensorCores.
    out = pl.pallas_call(
        kernel,
        out_shape=jax.ShapeDtypeStruct((1, 128), jnp.float32),
        grid=(steps,),
        in_specs=in_specs,
        out_specs=pl.BlockSpec((1, 128), lambda s: (0, 0)),
        scratch_shapes=[pltpu.VMEM((tr, C), jnp.float32)],
        compiler_params=pltpu.CompilerParams(
            dimension_semantics=("arbitrary",),
            vmem_limit_bytes=vmem_limit),
        cost_estimate=cost,
    )(*inputs)

    return out[0, 0], out[0, 1], out[0, 2], out[0, 3]


def _reference(x_recon, x, mu, logvar, graph, graph_prior, alpha, beta):
    x_recon = x_recon.astype(jnp.float32)
    x = x.astype(jnp.float32)
    mu = mu.astype(jnp.float32)
    logvar = logvar.astype(jnp.float32)
    graph = graph.astype(jnp.float32)
    loss_mse = jnp.mean((x_recon - x) ** 2)
    loss_kld = -0.5 * jnp.mean(1.0 + logvar - mu ** 2 - jnp.exp(logvar))
    if graph_prior is None:
        loss_graph = jnp.sum(jnp.abs(graph)) / graph.size
    else:
        loss_graph = jnp.sum(
            jnp.abs(graph - graph_prior.astype(jnp.float32))) / graph.size
    loss = loss_mse + alpha * loss_kld + beta * loss_graph
    return loss, loss_mse, loss_kld, loss_graph


if __name__ == "__main__":
    key = jax.random.PRNGKey(0)
    kxr, kx, kmu, klv, kg, kgp = jax.random.split(key, 6)

    B, D, L = 8, 16, 8          # small shapes consistent with the module
    alpha, beta = 1.0, 0.5

    x_recon = jax.random.normal(kxr, (B, D), dtype=jnp.float32)
    x = jax.random.normal(kx, (B, D), dtype=jnp.float32)
    mu = jax.random.normal(kmu, (B, L), dtype=jnp.float32) * 0.5
    logvar = jax.random.normal(klv, (B, L), dtype=jnp.float32) * 0.1
    graph = jax.random.normal(kg, (D, D), dtype=jnp.float32)
    graph_prior = jax.random.normal(kgp, (D, D), dtype=jnp.float32)

    # 1) No-prior variant (specialized kernel, no zero prior materialized).
    out0 = jax.block_until_ready(
        goggle_loss(x_recon, x, mu, logvar, graph, None, alpha=alpha, beta=beta))
    ref0 = _reference(x_recon, x, mu, logvar, graph, None, alpha, beta)
    for got, want in zip(out0, ref0):
        assert jnp.allclose(got, want, rtol=1e-5, atol=1e-5), (got, want)

    # 2) With-prior variant.
    out1 = jax.block_until_ready(
        goggle_loss(x_recon, x, mu, logvar, graph, graph_prior,
                    alpha=alpha, beta=beta))
    ref1 = _reference(x_recon, x, mu, logvar, graph, graph_prior, alpha, beta)
    for got, want in zip(out1, ref1):
        assert jnp.allclose(got, want, rtol=1e-5, atol=1e-5), (got, want)

    # 3) Native-dtype path: bf16 inputs are DMA'd as bf16 and upcast in-kernel.
    xb = x_recon.astype(jnp.bfloat16)
    x2 = x.astype(jnp.bfloat16)
    mub = mu.astype(jnp.bfloat16)
    lvb = logvar.astype(jnp.bfloat16)
    gb = graph.astype(jnp.bfloat16)
    out2 = jax.block_until_ready(
        goggle_loss(xb, x2, mub, lvb, gb, None, alpha=alpha, beta=beta))
    ref2 = _reference(xb, x2, mub, lvb, gb, None, alpha, beta)
    for got, want in zip(out2, ref2):
        assert jnp.allclose(got, want, rtol=1e-5, atol=1e-5), (got, want)

    print("KERNEL_OK")
</pallas_src>

<mosaic_0001>
module attributes {stable_mosaic.version = 11 : i64} {
  func.func @_goggle_loss_kernel(%arg0: i32, %arg1: memref<8x16xf32, #tpu.memory_space<vmem>>, %arg2: memref<8x16xf32, #tpu.memory_space<vmem>>, %arg3: memref<8x8xf32, #tpu.memory_space<vmem>>, %arg4: memref<8x8xf32, #tpu.memory_space<vmem>>, %arg5: memref<16x16xf32, #tpu.memory_space<vmem>>, %arg6: memref<1x128xf32, #tpu.memory_space<vmem>>, %arg7: memref<16x16xf32, #tpu.memory_space<vmem>>) attributes {dimension_semantics = [#tpu.dimension_semantics<arbitrary>], iteration_bounds = array<i64: 1>, scalar_prefetch = 0 : i64, scratch_operands = 1 : i64, tpu.core_type = #tpu.core_type<tc>, window_params = [{pipeline_mode = #tpu.pipeline_mode<synchronous>, transform_indices = @transform_0, window_bounds = array<i64: 8, 16>}, {pipeline_mode = #tpu.pipeline_mode<synchronous>, transform_indices = @transform_1, window_bounds = array<i64: 8, 16>}, {pipeline_mode = #tpu.pipeline_mode<synchronous>, transform_indices = @transform_2, window_bounds = array<i64: 8, 8>}, {pipeline_mode = #tpu.pipeline_mode<synchronous>, transform_indices = @transform_3, window_bounds = array<i64: 8, 8>}, {transform_indices = @transform_4, window_bounds = array<i64: 16, 16>}, {pipeline_mode = #tpu.pipeline_mode<synchronous>, transform_indices = @transform_5, window_bounds = array<i64: 1, 128>}]} {
    %c0_i32 = arith.constant 0 : i32
    %0 = arith.cmpi eq, %arg0, %c0_i32 : i32
    %1 = arith.extui %0 : i1 to i32
    %c0_i32_0 = arith.constant 0 : i32
    %2 = arith.cmpi ne, %1, %c0_i32_0 : i32
    scf.if %2 {
      %cst = arith.constant 0.000000e+00 : f32
      %11 = vector.broadcast %cst : f32 to vector<16x16xf32>
      %c0_8 = arith.constant 0 : index
      %c0_9 = arith.constant 0 : index
      %12 = vector.load %arg7[%c0_8, %c0_9] : memref<16x16xf32, #tpu.memory_space<vmem>>, vector<16x16xf32>
      tpu.vector_store %arg7[%c0_8, %c0_9], %11 {strides = array<i32>} : memref<16x16xf32, #tpu.memory_space<vmem>>, vector<16x16xf32>,
    } else {
    }
    %c0 = arith.constant 0 : index
    %c0_1 = arith.constant 0 : index
    %3 = vector.load %arg5[%c0, %c0_1] : memref<16x16xf32, #tpu.memory_space<vmem>>, vector<16x16xf32>
    %c0_2 = arith.constant 0 : index
    %c0_3 = arith.constant 0 : index
    %4 = vector.load %arg7[%c0_2, %c0_3] : memref<16x16xf32, #tpu.memory_space<vmem>>, vector<16x16xf32>
    %5 = math.absf %3 : vector<16x16xf32>
    %6 = arith.addf %4, %5 : vector<16x16xf32>
    %c0_4 = arith.constant 0 : index
    %c0_5 = arith.constant 0 : index
    %7 = vector.load %arg7[%c0_4, %c0_5] : memref<16x16xf32, #tpu.memory_space<vmem>>, vector<16x16xf32>
    tpu.vector_store %arg7[%c0_4, %c0_5], %6 {strides = array<i32>} : memref<16x16xf32, #tpu.memory_space<vmem>>, vector<16x16xf32>,
    %c0_i32_6 = arith.constant 0 : i32
    %8 = arith.cmpi eq, %arg0, %c0_i32_6 : i32
    %9 = arith.extui %8 : i1 to i32
    %c0_i32_7 = arith.constant 0 : i32
    %10 = arith.cmpi ne, %9, %c0_i32_7 : i32
    scf.if %10 {
      %c0_8 = arith.constant 0 : index
      %c0_9 = arith.constant 0 : index
      %11 = vector.load %arg1[%c0_8, %c0_9] : memref<8x16xf32, #tpu.memory_space<vmem>>, vector<8x16xf32>
      %c0_10 = arith.constant 0 : index
      %c0_11 = arith.constant 0 : index
      %12 = vector.load %arg2[%c0_10, %c0_11] : memref<8x16xf32, #tpu.memory_space<vmem>>, vector<8x16xf32>
      %13 = arith.subf %11, %12 : vector<8x16xf32>
      %14 = arith.mulf %13, %13 : vector<8x16xf32>
      %15 = vector.shape_cast %14 : vector<8x16xf32> to vector<1x8x16xf32>
      %cst = arith.constant dense<0.000000e+00> : vector<1xf32>
      %16 = vector.multi_reduction <add>, %15, %cst [1, 2] : vector<1x8x16xf32> to vector<1xf32>
      %17 = vector.shape_cast %16 : vector<1xf32> to vector<1x1x1xf32>
      %18 = vector.extract %17[0, 0, 0] : f32 from vector<1x1x1xf32>
      %cst_12 = arith.constant 7.812500e-03 : f32
      %19 = arith.mulf %18, %cst_12 : f32
      %c0_13 = arith.constant 0 : index
      %c0_14 = arith.constant 0 : index
      %20 = vector.load %arg3[%c0_13, %c0_14] : memref<8x8xf32, #tpu.memory_space<vmem>>, vector<8x8xf32>
      %c0_15 = arith.constant 0 : index
      %c0_16 = arith.constant 0 : index
      %21 = vector.load %arg4[%c0_15, %c0_16] : memref<8x8xf32, #tpu.memory_space<vmem>>, vector<8x8xf32>
      %cst_17 = arith.constant 1.000000e+00 : f32
      %22 = vector.broadcast %cst_17 : f32 to vector<8x8xf32>
      %23 = arith.addf %22, %21 : vector<8x8xf32>
      %24 = arith.mulf %20, %20 : vector<8x8xf32>
      %25 = arith.subf %23, %24 : vector<8x8xf32>
      %26 = math.exp %21 : vector<8x8xf32>
      %27 = arith.subf %25, %26 : vector<8x8xf32>
      %28 = vector.shape_cast %27 : vector<8x8xf32> to vector<1x8x8xf32>
      %cst_18 = arith.constant dense<0.000000e+00> : vector<1xf32>
      %29 = vector.multi_reduction <add>, %28, %cst_18 [1, 2] : vector<1x8x8xf32> to vector<1xf32>
      %30 = vector.shape_cast %29 : vector<1xf32> to vector<1x1x1xf32>
      %31 = vector.extract %30[0, 0, 0] : f32 from vector<1x1x1xf32>
      %cst_19 = arith.constant -5.000000e-01 : f32
      %32 = arith.mulf %cst_19, %31 : f32
      %cst_20 = arith.constant 1.562500e-02 : f32
      %33 = arith.mulf %32, %cst_20 : f32
      %c0_21 = arith.constant 0 : index
      %c0_22 = arith.constant 0 : index
      %34 = vector.load %arg7[%c0_21, %c0_22] : memref<16x16xf32, #tpu.memory_space<vmem>>, vector<16x16xf32>
      %35 = vector.shape_cast %34 : vector<16x16xf32> to vector<1x16x16xf32>
      %cst_23 = arith.constant dense<0.000000e+00> : vector<1xf32>
      %36 = vector.multi_reduction <add>, %35, %cst_23 [1, 2] : vector<1x16x16xf32> to vector<1xf32>
      %37 = vector.shape_cast %36 : vector<1xf32> to vector<1x1x1xf32>
      %38 = vector.extract %37[0, 0, 0] : f32 from vector<1x1x1xf32>
      %cst_24 = arith.constant 3.906250e-03 : f32
      %39 = arith.mulf %38, %cst_24 : f32
      %cst_25 = arith.constant 1.000000e+00 : f32
      %40 = arith.mulf %cst_25, %33 : f32
      %41 = arith.addf %19, %40 : f32
      %cst_26 = arith.constant 5.000000e-01 : f32
      %42 = arith.mulf %cst_26, %39 : f32
      %43 = arith.addf %41, %42 : f32
      %44 = tpu.iota {dimensions = array<i32: 1>} : vector<1x128xi32>
      %c0_i32_27 = arith.constant 0 : i32
      %45 = vector.broadcast %c0_i32_27 : i32 to vector<1x128xi32>
      %46 = arith.cmpi eq, %44, %45 : vector<1x128xi32>
      %c1_i32 = arith.constant 1 : i32
      %47 = vector.broadcast %c1_i32 : i32 to vector<1x128xi32>
      %48 = arith.cmpi eq, %44, %47 : vector<1x128xi32>
      %c2_i32 = arith.constant 2 : i32
      %49 = vector.broadcast %c2_i32 : i32 to vector<1x128xi32>
      %50 = arith.cmpi eq, %44, %49 : vector<1x128xi32>
      %c3_i32 = arith.constant 3 : i32
      %51 = vector.broadcast %c3_i32 : i32 to vector<1x128xi32>
      %52 = arith.cmpi eq, %44, %51 : vector<1x128xi32>
      %cst_28 = arith.constant 0.000000e+00 : f32
      %53 = vector.broadcast %39 : f32 to vector<1x128xf32>
      %54 = vector.broadcast %cst_28 : f32 to vector<1x128xf32>
      %55 = arith.select %52, %53, %54 : vector<1x128xi1>, vector<1x128xf32>
      %56 = vector.broadcast %33 : f32 to vector<1x128xf32>
      %57 = arith.select %50, %56, %55 : vector<1x128xi1>, vector<1x128xf32>
      %58 = vector.broadcast %19 : f32 to vector<1x128xf32>
      %59 = arith.select %48, %58, %57 : vector<1x128xi1>, vector<1x128xf32>
      %60 = vector.broadcast %43 : f32 to vector<1x128xf32>
      %61 = arith.select %46, %60, %59 : vector<1x128xi1>, vector<1x128xf32>
      %c0_29 = arith.constant 0 : index
      %c0_30 = arith.constant 0 : index
      %62 = vector.load %arg6[%c0_29, %c0_30] : memref<1x128xf32, #tpu.memory_space<vmem>>, vector<1x128xf32>
      tpu.vector_store %arg6[%c0_29, %c0_30], %61 {strides = array<i32>} : memref<1x128xf32, #tpu.memory_space<vmem>>, vector<1x128xf32>,
    } else {
    }
    return
  }
  func.func @transform_0(%arg0: i32) -> (i32, i32) {
    %c0_i32 = arith.constant 0 : i32
    %c0_i32_0 = arith.constant 0 : i32
    %c0_i32_1 = arith.constant 0 : i32
    return %c0_i32, %c0_i32_0 : i32, i32
  }
  func.func @transform_1(%arg0: i32) -> (i32, i32) {
    %c0_i32 = arith.constant 0 : i32
    %c0_i32_0 = arith.constant 0 : i32
    %c0_i32_1 = arith.constant 0 : i32
    return %c0_i32, %c0_i32_0 : i32, i32
  }
  func.func @transform_2(%arg0: i32) -> (i32, i32) {
    %c0_i32 = arith.constant 0 : i32
    %c0_i32_0 = arith.constant 0 : i32
    %c0_i32_1 = arith.constant 0 : i32
    return %c0_i32, %c0_i32_0 : i32, i32
  }
  func.func @transform_3(%arg0: i32) -> (i32, i32) {
    %c0_i32 = arith.constant 0 : i32
    %c0_i32_0 = arith.constant 0 : i32
    %c0_i32_1 = arith.constant 0 : i32
    return %c0_i32, %c0_i32_0 : i32, i32
  }
  func.func @transform_4(%arg0: i32) -> (i32, i32) {
    %c0_i32 = arith.constant 0 : i32
    %c0_i32_0 = arith.constant 0 : i32
    return %arg0, %c0_i32 : i32, i32
  }
  func.func @transform_5(%arg0: i32) -> (i32, i32) {
    %c0_i32 = arith.constant 0 : i32
    %c0_i32_0 = arith.constant 0 : i32
    %c0_i32_1 = arith.constant 0 : i32
    return %c0_i32, %c0_i32_0 : i32, i32
  }
}

</mosaic_0001>

<llo_original>
// kernel: tpu_custom_call.1
$region0: #{tpu_custom_call.1}
  #allocation0 [shape = 'u32[]', space=smem, size = 0x4, offset = 0x4, fixed_abs, tag = 'smem constant byte address 0x4 - core index']
  #allocation1 [shape = 'u32[72,128]{1,0:T(1,128)}', space=vmem, size = 0x9000, scoped, tag = 'internal scratch']
  #allocation2 [shape = 'f32[16,16]{1,0:T(8,128)}', space=vmem, size = 0x2000, scoped, tag = 'scratch operand']
  %s0 = inlined_call_operand.hbm [shape: f32[8,16], index: 0, kind: input, shape index: {}]
  %s1 = inlined_call_operand.hbm [shape: f32[8,16], index: 1, kind: input, shape index: {}]
  %s2 = inlined_call_operand.hbm [shape: f32[8,8], index: 2, kind: input, shape index: {}]
  %s3 = inlined_call_operand.hbm [shape: f32[8,8], index: 3, kind: input, shape index: {}]
  %s4 = inlined_call_operand.hbm [shape: f32[16,16], index: 4, kind: input, shape index: {}]
  %s5 = inlined_call_operand.hbm [shape: f32[1,128], index: 5, kind: output, shape index: {}]
  %s6 = sld [smem:[#allocation0]]
  $region58: #{tpu_custom_call.1} parent=0
    _
  %s8 = ssub.s32 1, %s6
  %s9 = scalar_select 0, %s8, %s6
  $region1: #{tpu_custom_call.1} parent=0
    #allocation3 [shape = 'u8[4096]{0}', space=vmem, size = 0x1000, scoped, tag = 'input window, operand 0, single buffered']
    #allocation4 [shape = 's32[1]{0}', space=sflag, size = 0x4, scoped, tag = 'scoped memory for tpu_custom_call.1']
    #allocation5 [shape = 's32[1]{0}', space=sflag, size = 0x4, scoped, tag = 'scoped memory for tpu_custom_call.1']
    #allocation6 [shape = 'u8[4096]{0}', space=vmem, size = 0x1000, scoped, tag = 'input window, operand 1, single buffered']
    #allocation7 [shape = 's32[1]{0}', space=sflag, size = 0x4, scoped, tag = 'scoped memory for tpu_custom_call.1']
    #allocation8 [shape = 'u8[4096]{0}', space=vmem, size = 0x1000, scoped, tag = 'input window, operand 2, single buffered']
    #allocation9 [shape = 'u8[4096]{0}', space=vmem, size = 0x1000, scoped, tag = 'input window, operand 3, single buffered']
    #allocation10 [shape = 's32[1]{0}', space=sflag, size = 0x4, scoped, tag = 'scoped memory for tpu_custom_call.1']
    #allocation11 [shape = 'u8[8192]{0}', space=vmem, size = 0x2000, scoped, tag = 'input window, operand 4, single buffered']
    #allocation12 [shape = 'u8[512]{0}', space=vmem, size = 0x400, scoped, tag = 'output window, operand 0, single buffered']
    %10 = vsyncpa [#allocation4], 0
    %11 = vsyncpa [#allocation7], 0
    %12 = vsyncpa [#allocation10], 0
    %13 = vsyncpa [#allocation5], 0
    // Predicated region
    $region2: #{tpu_custom_call.1} parent=1 // pred_check
      _
    $region3: #{tpu_custom_call.1} parent=1 // pred_check_branch
      %15 = sbr.rel (0) target = $region5
    $region4: #{tpu_custom_call.1} parent=1 // pred_region
      %17 = vsyncadd [#allocation4], 0
      %s19 = sshll.u32 %s0, 4
      %s20 = int_to_ptr.hbm [resolvable:$true] %s19
      %s21 = sshll.u32 [#allocation3], 4
      %s22 = int_to_ptr.vmem [resolvable:$true] %s21
      %24 = dma.hbm_to_vmem [thread:$0]  %s20, 128, %s22, [#allocation4]
    $region5: #{tpu_custom_call.1} parent=1 // pred_fallthru
      _
    // Predicated region
    $region6: #{tpu_custom_call.1} parent=1 // pred_check
      _
    $region7: #{tpu_custom_call.1} parent=1 // pred_check_branch
      %26 = sbr.rel (0) target = $region9
    $region8: #{tpu_custom_call.1} parent=1 // pred_region
      %28 = vsyncadd [#allocation7], 0
      %s30 = sshll.u32 %s1, 4
      %s31 = int_to_ptr.hbm [resolvable:$true] %s30
      %s32 = sshll.u32 [#allocation6], 4
      %s33 = int_to_ptr.vmem [resolvable:$true] %s32
      %35 = dma.hbm_to_vmem [thread:$0]  %s31, 128, %s33, [#allocation7]
    $region9: #{tpu_custom_call.1} parent=1 // pred_fallthru
      _
    // Predicated region
    $region10: #{tpu_custom_call.1} parent=1 // pred_check
      _
    $region11: #{tpu_custom_call.1} parent=1 // pred_check_branch
      %37 = sbr.rel (0) target = $region13
    $region12: #{tpu_custom_call.1} parent=1 // pred_region
      %39 = vsyncadd [#allocation7], 0
      %s41 = sshll.u32 %s2, 4
      %s42 = int_to_ptr.hbm [resolvable:$true] %s41
      %s43 = sshll.u32 [#allocation8], 4
      %s44 = int_to_ptr.vmem [resolvable:$true] %s43
      %46 = dma.hbm_to_vmem [thread:$0]  %s42, 128, %s44, [#allocation7]
    $region13: #{tpu_custom_call.1} parent=1 // pred_fallthru
      _
    // Predicated region
    $region14: #{tpu_custom_call.1} parent=1 // pred_check
      _
    $region15: #{tpu_custom_call.1} parent=1 // pred_check_branch
      %48 = sbr.rel (0) target = $region17
    $region16: #{tpu_custom_call.1} parent=1 // pred_region
      %50 = vsyncadd [#allocation10], 0
      %s52 = sshll.u32 %s3, 4
      %s53 = int_to_ptr.hbm [resolvable:$true] %s52
      %s54 = sshll.u32 [#allocation9], 4
      %s55 = int_to_ptr.vmem [resolvable:$true] %s54
      %57 = dma.hbm_to_vmem [thread:$0]  %s53, 128, %s55, [#allocation10]
    $region17: #{tpu_custom_call.1} parent=1 // pred_fallthru
      _
    // Predicated region
    $region18: #{tpu_custom_call.1} parent=1 // pred_check
      _
    $region19: #{tpu_custom_call.1} parent=1 // pred_check_branch
      %59 = sbr.rel (0) target = $region21
    $region20: #{tpu_custom_call.1} parent=1 // pred_region
      %61 = vsyncadd [#allocation10], 0
      %s62 = sshll.u32 %s4, 4
      %s63 = int_to_ptr.hbm [resolvable:$true] %s62
      %s64 = sshll.u32 [#allocation11], 4
      %s65 = int_to_ptr.vmem [resolvable:$true] %s64
      %70 = dma.hbm_to_vmem [thread:$0]  %s63, 256, %s65, [#allocation10], 128, 128, 8
    $region21: #{tpu_custom_call.1} parent=1 // pred_fallthru
      _
    // Predicated region
    $region22: #{tpu_custom_call.1} parent=1 // pred_check
      _
    $region23: #{tpu_custom_call.1} parent=1 // pred_check_branch
      %72 = sbr.rel (0) target = $region25
    $region24: #{tpu_custom_call.1} parent=1 // pred_region
      %74 = dma.done [#allocation4], 128
    $region25: #{tpu_custom_call.1} parent=1 // pred_fallthru
      _
    // Predicated region
    $region26: #{tpu_custom_call.1} parent=1 // pred_check
      _
    $region27: #{tpu_custom_call.1} parent=1 // pred_check_branch
      %76 = sbr.rel (0) target = $region29
    $region28: #{tpu_custom_call.1} parent=1 // pred_region
      %78 = dma.done [#allocation7], 128
    $region29: #{tpu_custom_call.1} parent=1 // pred_fallthru
      _
    // Predicated region
    $region30: #{tpu_custom_call.1} parent=1 // pred_check
      _
    $region31: #{tpu_custom_call.1} parent=1 // pred_check_branch
      %80 = sbr.rel (0) target = $region33
    $region32: #{tpu_custom_call.1} parent=1 // pred_region
      %82 = dma.done [#allocation7], 128
    $region33: #{tpu_custom_call.1} parent=1 // pred_fallthru
      _
    // Predicated region
    $region34: #{tpu_custom_call.1} parent=1 // pred_check
      _
    $region35: #{tpu_custom_call.1} parent=1 // pred_check_branch
      %84 = sbr.rel (0) target = $region37
    $region36: #{tpu_custom_call.1} parent=1 // pred_region
      %86 = dma.done [#allocation10], 128
    $region37: #{tpu_custom_call.1} parent=1 // pred_fallthru
      _
    // Predicated region
    $region38: #{tpu_custom_call.1} parent=1 // pred_check
      _
    $region39: #{tpu_custom_call.1} parent=1 // pred_check_branch
      %88 = sbr.rel (0) target = $region41
    $region40: #{tpu_custom_call.1} parent=1 // pred_region
      %90 = dma.done [#allocation10], 256
    $region41: #{tpu_custom_call.1} parent=1 // pred_fallthru
      _
    %p91 = scmp.eq.s32.totalorder 0, 0
    // Predicated region
    $region42: #{tpu_custom_call.1} parent=1 // pred_check
      %p92 = pneg %p91
    $region43: #{tpu_custom_call.1} parent=1 // pred_check_branch
      %94 = sbr.rel (%p92) target = $region45
    $region44: #{tpu_custom_call.1} parent=1 // pred_region
      %vm95 = vcmask 130048
      %96 = vst.msk [vmem:[#allocation2] sm:$0xff] %vm95, 0.0
      %97 = vst.msk [vmem:[#allocation2 + $0x8] sm:$0xff] %vm95, 0.0
    $region45: #{tpu_custom_call.1} parent=1 // pred_fallthru
      _
    %v98 = vld [vmem:[#allocation11] sm:$0xff]
    %v99 = vld [vmem:[#allocation11 + $0x8] sm:$0xff]
    %v100 = vld [vmem:[#allocation2] sm:$0xff]
    %v101 = vld [vmem:[#allocation2 + $0x8] sm:$0xff]
    %v102 = vand.u32 2147483647, %v98
    %v103 = vand.u32 2147483647, %v99
    %v104 = vadd.f32 %v100, %v102
    %v105 = vadd.f32 %v101, %v103
    %vm106 = vcmask 130048
    %107 = vst.msk [vmem:[#allocation2] sm:$0xff] %vm106, %v104
    %108 = vst.msk [vmem:[#allocation2 + $0x8] sm:$0xff] %vm106, %v105
    // Predicated region
    $region46: #{tpu_custom_call.1} parent=1 // pred_check
      %p109 = pneg %p91
    $region47: #{tpu_custom_call.1} parent=1 // pred_check_branch
      %111 = sbr.rel (%p109) target = $region49
    $region48: #{tpu_custom_call.1} parent=1 // pred_region
      %v112 = vld [vmem:[#allocation3] sm:$0xff]
      %v113 = vld [vmem:[#allocation6] sm:$0xff]
      %v114 = vsub.f32 %v112, %v113
      %v115 = vmul.f32 %v114, %v114
      %v116 = vsel %vm106, %v115, 0.0
      %117 = vadd.xlane.f32.xlu0 %v116
      %v118 = vpop.xlane.xlu0 %117
      %v119 = vrot.slane %v118, 4
      %v120 = vadd.f32 %v118, %v119
      %v121 = vrot.slane %v120, 2
      %v122 = vadd.f32 %v120, %v121
      %v123 = vrot.slane %v122, 1
      %v124 = vadd.f32 %v122, %v123
      %s125 = vtos %v124
      %s126 = smul.f32 %s125, 0.0078125
      %v127 = vld [vmem:[#allocation8] sm:$0xff]
      %v128 = vld [vmem:[#allocation9] sm:$0xff]
      %v129 = vadd.f32 %v128, 1.0
      %v130 = vmul.f32 %v127, %v127
      %v131 = vsub.f32 %v129, %v130
      %v132 = vmul.f32 %v128, 1.442695
      %v133 = vpow.pop %v132
      %v134 = vsub.f32 %v131, %v133
      %vm135 = vcmask 64512
      %v136 = vsel %vm135, %v134, 0.0
      %137 = vadd.xlane.f32.xlu0 %v136
      %v138 = vpop.xlane.xlu0 %137
      %v139 = vrot.slane %v138, 4
      %v140 = vadd.f32 %v138, %v139
      %v141 = vrot.slane %v140, 2
      %v142 = vadd.f32 %v140, %v141
      %v143 = vrot.slane %v142, 1
      %v144 = vadd.f32 %v142, %v143
      %s145 = vtos %v144
      %s146 = smul.f32 %s145, -0.5
      %s147 = smul.f32 %s146, 0.015625
      %v148 = vld [vmem:[#allocation2] sm:$0xff]
      %v149 = vld [vmem:[#allocation2 + $0x8] sm:$0xff]
      %v150 = vsel %vm106, %v148, 0.0
      %v151 = vsel %vm106, %v149, 0.0
      %v152 = vadd.f32 %v150, %v151
      %153 = vadd.xlane.f32.xlu0 %v152
      %v154 = vpop.xlane.xlu0 %153
      %v155 = vrot.slane %v154, 4
      %v156 = vadd.f32 %v154, %v155
      %v157 = vrot.slane %v156, 2
      %v158 = vadd.f32 %v156, %v157
      %v159 = vrot.slane %v158, 1
      %v160 = vadd.f32 %v158, %v159
      %s161 = vtos %v160
      %s162 = smul.f32 %s161, 0.00390625
      %s163 = sadd.f32 %s126, %s147
      %s164 = smul.f32 %s162, 0.5
      %s165 = sadd.f32 %s163, %s164
      %v166 = vlaneseq
      %v167 = vand.u32 %v166, 127
      %vm168 = vcmp.eq.s32.totalorder %v167, 0
      %vm169 = vcmp.eq.s32.totalorder %v167, 1
      %vm170 = vcmp.eq.s32.totalorder %v167, 2
      %vm171 = vcmp.eq.s32.totalorder %v167, 3
      %v172 = vstv %s162
      %v173 = vsel %vm171, %v172, 0.0
      %v174 = vstv %s147
      %v175 = vsel %vm170, %v174, %v173
      %v176 = vstv %s126
      %v177 = vsel %vm169, %v176, %v175
      %v178 = vstv %s165
      %v179 = vsel %vm168, %v178, %v177
      %180 = vst [vmem:[#allocation12] sm:$0x1] %v179
    $region49: #{tpu_custom_call.1} parent=1 // pred_fallthru
      _
    // Predicated region
    $region50: #{tpu_custom_call.1} parent=1 // pred_check
      _
    $region51: #{tpu_custom_call.1} parent=1 // pred_check_branch
      %182 = sbr.rel (0) target = $region53
    $region52: #{tpu_custom_call.1} parent=1 // pred_region
      %184 = vsyncadd [#allocation5], 0
      %s186 = sshll.u32 [#allocation12], 4
      %s187 = int_to_ptr.vmem [resolvable:$true] %s186
      %s188 = sshll.u32 %s5, 4
      %s189 = int_to_ptr.hbm [resolvable:$true] %s188
      %191 = dma.vmem_to_hbm [thread:$0]  %s187, 16, %s189, [#allocation5]
    $region53: #{tpu_custom_call.1} parent=1 // pred_fallthru
      _
    // Predicated region
    $region54: #{tpu_custom_call.1} parent=1 // pred_check
      _
    $region55: #{tpu_custom_call.1} parent=1 // pred_check_branch
      %193 = sbr.rel (0) target = $region57
    $region56: #{tpu_custom_call.1} parent=1 // pred_region
      %195 = dma.done [#allocation5], 16
    $region57: #{tpu_custom_call.1} parent=1 // pred_fallthru
      _
    %196 = vsyncpa [#allocation4], 1
    %197 = vsyncpa [#allocation7], 1
    %198 = vsyncpa [#allocation10], 1
    %199 = vsyncpa [#allocation5], 1

</llo_original>
